<compile_context>
chip_gen: v7x
topology: tpu7x:2x2x1
jax: 0.10.0
libtpu: 0.0.40
codegen_flags: <defaults>
</compile_context>

<pallas_src>
import functools

import jax
import jax.numpy as jnp
from jax import lax
from jax.experimental import pallas as pl
from jax.experimental.pallas import tpu as pltpu


# ----------------------------------------------------------------------------
# Kernel 1: row-tiled matmul + bias.
#   Used for (a) the fused 1x1 conv over the image feature map — projecting to
#   NFC * num_heads * num_layers channels in ONE pass — and (b) the per-layer
#   emb_roi projection batched over all BT*N ROI rows.
# ----------------------------------------------------------------------------
def _matmul_bias_kernel(x_ref, w_ref, b_ref, o_ref):
    o_ref[...] = (
        jnp.dot(x_ref[...], w_ref[...], preferred_element_type=jnp.float32)
        + b_ref[...]
    ).astype(o_ref.dtype)


def matmul_bias(x, w, b, *, tm=512):
    """x: (M, K), w: (K, C), b: (1, C) -> (M, C) float32.

    Rows are tiled (tm) so Pallas double-buffers the input stream and the grid
    axis can be sharded across TensorCores ("parallel").  With tm=512 the
    working set is a few MiB — far under the 32 MiB scoped-VMEM default, so no
    vmem_limit override is needed even on v7x.
    """
    M, K = x.shape
    C = w.shape[1]
    if M <= tm:
        tm_eff, Mp, xp = M, M, x              # single full-extent block
    else:
        tm_eff = tm
        Mp = pl.cdiv(M, tm_eff) * tm_eff
        xp = jnp.pad(x, ((0, Mp - M), (0, 0))) if Mp != M else x
    cost = pl.CostEstimate(
        flops=2 * Mp * K * C,
        transcendentals=0,
        bytes_accessed=4 * (Mp * K + K * C + C + Mp * C),
    )
    out = pl.pallas_call(
        _matmul_bias_kernel,
        out_shape=jax.ShapeDtypeStruct((Mp, C), jnp.float32),
        grid=(Mp // tm_eff,),
        in_specs=[
            pl.BlockSpec((tm_eff, K), lambda i: (i, 0)),
            pl.BlockSpec((K, C), lambda i: (0, 0)),
            pl.BlockSpec((1, C), lambda i: (0, 0)),
        ],
        out_specs=pl.BlockSpec((tm_eff, C), lambda i: (i, 0)),
        compiler_params=pltpu.CompilerParams(dimension_semantics=("parallel",)),
        cost_estimate=cost,
    )(xp, w, b)
    return out[:M] if Mp != M else out


# ----------------------------------------------------------------------------
# Kernel 2: one layer, ALL heads fused, per BT sample:
#   for each head h (emb / img are the head's NFC-column slice):
#     A   = softmax(emb_h @ img_h^T)          (over the OH*OW spatial axis)
#     ctx = A @ img_h
#     x   = LN1(ctx + emb_h)
#     x   = LN2(x + FFN(x)),  FFN = Linear -> ReLU -> Linear
#   output = concat_h(x)   -> lane-dense (N, num_heads*NFC) store
# ----------------------------------------------------------------------------
def _layernorm(x, g, b, eps=1e-5):
    mu = jnp.mean(x, axis=-1, keepdims=True)
    var = jnp.mean((x - mu) * (x - mu), axis=-1, keepdims=True)
    return (x - mu) * lax.rsqrt(var + eps) * g + b


def _layer_heads_kernel(emb_ref, img_ref,
                        ln1g_ref, ln1b_ref, w1_ref, b1_ref, w2_ref, b2_ref,
                        ln2g_ref, ln2b_ref, o_ref, *, num_heads, nfc):
    emb_all = emb_ref[0]                       # (N, H*NFC), bias already added
    img_all = img_ref[0]                       # (S, H*NFC)

    outs = []
    for h in range(num_heads):                 # static unroll over heads
        c0 = h * nfc
        emb = emb_all[:, c0:c0 + nfc]          # (N, NFC)
        img = img_all[:, c0:c0 + nfc]          # (S, NFC)

        # attention logits: contract NFC on both operands — no explicit
        # transpose of the image tile is materialized.
        logits = lax.dot_general(
            emb, img, dimension_numbers=(((1,), (1,)), ((), ())),
            preferred_element_type=jnp.float32)                    # (N, S)
        m = jnp.max(logits, axis=-1, keepdims=True)
        e = jnp.exp(logits - m)
        attn = e * pl.reciprocal(jnp.sum(e, axis=-1, keepdims=True), approx=True)

        # context encoding + residual + LN1
        ctx = jnp.dot(attn, img, preferred_element_type=jnp.float32)  # (N, NFC)
        x = _layernorm(ctx + emb, ln1g_ref[h], ln1b_ref[h])

        # FFN + residual + LN2   (dropout == identity in eval mode)
        hid = jnp.maximum(
            jnp.dot(x, w1_ref[h], preferred_element_type=jnp.float32) + b1_ref[h],
            0.0)
        f = jnp.dot(hid, w2_ref[h], preferred_element_type=jnp.float32) + b2_ref[h]
        outs.append(_layernorm(x + f, ln2g_ref[h], ln2b_ref[h]))

    # single lane-dense store of all heads (num_heads*NFC lanes wide)
    o_ref[0] = jnp.concatenate(outs, axis=-1).astype(o_ref.dtype)


def layer_heads(emb, img, p, *, nfc, num_heads):
    """emb: (BT, N, H*NFC), img: (BT, S, H*NFC) -> (BT, N, H*NFC)."""
    BT, N, HC = emb.shape
    S = img.shape[1]
    kernel = functools.partial(_layer_heads_kernel, num_heads=num_heads, nfc=nfc)
    cost = pl.CostEstimate(
        flops=BT * num_heads * (4 * N * S * nfc + 4 * N * nfc * nfc),
        transcendentals=BT * num_heads * N * (S + 3),
        bytes_accessed=4 * (2 * BT * N * HC + BT * S * HC
                            + num_heads * (2 * nfc * nfc + 6 * nfc)),
    )
    full3 = lambda b: (0, 0, 0)
    return pl.pallas_call(
        kernel,
        out_shape=jax.ShapeDtypeStruct((BT, N, HC), jnp.float32),
        grid=(BT,),
        in_specs=[
            pl.BlockSpec((1, N, HC), lambda b: (b, 0, 0)),
            pl.BlockSpec((1, S, HC), lambda b: (b, 0, 0)),
            pl.BlockSpec(p["ln1_g"].shape, full3),
            pl.BlockSpec(p["ln1_b"].shape, full3),
            pl.BlockSpec(p["ffn_w1"].shape, full3),
            pl.BlockSpec(p["ffn_b1"].shape, full3),
            pl.BlockSpec(p["ffn_w2"].shape, full3),
            pl.BlockSpec(p["ffn_b2"].shape, full3),
            pl.BlockSpec(p["ln2_g"].shape, full3),
            pl.BlockSpec(p["ln2_b"].shape, full3),
        ],
        out_specs=pl.BlockSpec((1, N, HC), lambda b: (b, 0, 0)),
        compiler_params=pltpu.CompilerParams(dimension_semantics=("parallel",)),
        cost_estimate=cost,
    )(emb, img, p["ln1_g"], p["ln1_b"], p["ffn_w1"], p["ffn_b1"],
      p["ffn_w2"], p["ffn_b2"], p["ln2_g"], p["ln2_b"])


# ----------------------------------------------------------------------------
# Parameter initialization (deterministic, synthetic — no checkpoint).
# Per layer, head parameters are stacked: columns [h*NFC:(h+1)*NFC] of
# conv_w / conv_b / emb_w / emb_b belong to head h; per-head tensors are
# stacked along a leading head axis.
# ----------------------------------------------------------------------------
def init_params(key, num_layers, num_heads, NFC, NFB, D=768):
    params = []
    HC = NFC * num_heads
    for i in range(num_layers):
        fin = NFB if i == 0 else HC
        key, k0, k1, k2, k3, k4, k5, k6, k7 = jax.random.split(key, 9)
        p = {
            # 1x1 conv: torch weight (NFC, 768, 1, 1) per head -> (768, H*NFC)
            "conv_w": jax.random.normal(k0, (D, HC), jnp.float32) * (2.0 / D) ** 0.5,
            "conv_b": jax.random.normal(k1, (1, HC), jnp.float32) * 0.01,
            # emb_roi linear: torch weight (NFC, fin) per head -> (fin, H*NFC)
            "emb_w": jax.random.normal(k2, (fin, HC), jnp.float32) * (1.0 / fin) ** 0.5,
            "emb_b": jax.random.normal(k3, (1, HC), jnp.float32) * 0.01,
            "ln1_g": jnp.ones((num_heads, 1, NFC), jnp.float32),
            "ln1_b": jnp.zeros((num_heads, 1, NFC), jnp.float32),
            "ffn_w1": jax.random.normal(k4, (num_heads, NFC, NFC), jnp.float32) * (1.0 / NFC) ** 0.5,
            "ffn_b1": jax.random.normal(k5, (num_heads, 1, NFC), jnp.float32) * 0.01,
            "ffn_w2": jax.random.normal(k6, (num_heads, NFC, NFC), jnp.float32) * (1.0 / NFC) ** 0.5,
            "ffn_b2": jax.random.normal(k7, (num_heads, 1, NFC), jnp.float32) * 0.01,
            "ln2_g": jnp.ones((num_heads, 1, NFC), jnp.float32),
            "ln2_b": jnp.zeros((num_heads, 1, NFC), jnp.float32),
        }
        params.append(p)
    return params


# ----------------------------------------------------------------------------
# Full multi-head / multi-layer forward (Pallas hot path, thin JAX glue)
# ----------------------------------------------------------------------------
def mhl_forward(roi_feature, image_feature, N, params, *, tm=512,
                matmul_dtype=jnp.float32):
    """roi_feature: (BT*N, NFB), image_feature NCHW: (BT, 768, OH, OW).

    matmul_dtype=jnp.bfloat16 feeds the MXU bf16 (f32 accumulation) on
    v6e/v7x; default f32 matches the reference bit-for-bit in tolerance.
    """
    BT, D, OH, OW = image_feature.shape
    S = OH * OW
    # NCHW -> (BT*S, D), spatial index s = oh*OW + ow (matches torch reshape order)
    x_flat = jnp.transpose(image_feature, (0, 2, 3, 1)).reshape(BT * S, D)

    # Fused 1x1 conv: ONE tiled pass over the image activation computes the
    # downsample projection for every head of every layer.
    w_all = jnp.concatenate([p["conv_w"] for p in params], axis=1)
    b_all = jnp.concatenate([p["conv_b"] for p in params], axis=1)
    img_all = matmul_bias(x_flat.astype(matmul_dtype), w_all.astype(matmul_dtype),
                          b_all, tm=tm)                   # (BT*S, sum_l H*NFC)

    roi = roi_feature
    col = 0
    for p in params:
        H = p["ffn_w1"].shape[0]
        HC = p["conv_w"].shape[1]
        NFC = HC // H
        img_l = img_all[:, col:col + HC].reshape(BT, S, HC)
        col += HC
        # emb_roi projection for all heads, batched over all BT*N rows.
        emb = matmul_bias(roi.astype(matmul_dtype), p["emb_w"].astype(matmul_dtype),
                          p["emb_b"], tm=tm).reshape(BT, N, HC)
        roi = layer_heads(emb, img_l, p, nfc=NFC, num_heads=H).reshape(BT * N, HC)
    return roi


# ----------------------------------------------------------------------------
# Pure-JAX reference (mirrors the PyTorch forward, eval mode) for validation
# ----------------------------------------------------------------------------
def mhl_reference(roi_feature, image_feature, N, params):
    HIGH = jax.lax.Precision.HIGHEST
    BT, D, OH, OW = image_feature.shape
    S = OH * OW
    img_flat = jnp.transpose(image_feature, (0, 2, 3, 1)).reshape(BT, S, D)

    def layernorm(x, g, b, eps=1e-5):
        mu = jnp.mean(x, axis=-1, keepdims=True)
        var = jnp.mean((x - mu) ** 2, axis=-1, keepdims=True)
        return (x - mu) / jnp.sqrt(var + eps) * g + b

    roi = roi_feature
    for p in params:
        H = p["ffn_w1"].shape[0]
        HC = p["conv_w"].shape[1]
        NFC = HC // H
        outs = []
        for h in range(H):
            sl = slice(h * NFC, (h + 1) * NFC)
            img = jnp.einsum("bsd,dc->bsc", img_flat, p["conv_w"][:, sl],
                             precision=HIGH) + p["conv_b"][:, sl]
            emb = (jnp.dot(roi, p["emb_w"][:, sl], precision=HIGH)
                   + p["emb_b"][:, sl]).reshape(BT, N, NFC)
            logits = jnp.einsum("bnc,bsc->bns", emb, img, precision=HIGH)
            attn = jax.nn.softmax(logits, axis=-1)
            ctx = jnp.einsum("bns,bsc->bnc", attn, img, precision=HIGH)
            x = layernorm(ctx + emb, p["ln1_g"][h, 0], p["ln1_b"][h, 0])
            xr = x.reshape(BT * N, NFC)
            hid = jnp.maximum(jnp.dot(xr, p["ffn_w1"][h], precision=HIGH)
                              + p["ffn_b1"][h, 0], 0.0)
            f = jnp.dot(hid, p["ffn_w2"][h], precision=HIGH) + p["ffn_b2"][h, 0]
            outs.append(layernorm(xr + f, p["ln2_g"][h, 0], p["ln2_b"][h, 0]))
        roi = jnp.concatenate(outs, axis=1)
    return roi


if __name__ == "__main__":
    # Small, module-consistent shapes (conv in-channels fixed to 768 by the
    # module).  NFC*num_heads = 128 so the fused-head output is lane-dense.
    BT, N, NFB, NFC = 2, 3, 64, 64
    num_layers, num_heads = 2, 2
    D, OH, OW = 768, 8, 12

    key = jax.random.PRNGKey(0)
    k_roi, k_img, k_par = jax.random.split(key, 3)
    roi_feature = jax.random.normal(k_roi, (BT * N, NFB), jnp.float32)
    image_feature = jax.random.normal(k_img, (BT, D, OH, OW), jnp.float32)
    params = init_params(k_par, num_layers, num_heads, NFC, NFB, D)

    out = jax.block_until_ready(mhl_forward(roi_feature, image_feature, N, params))
    assert out.shape == (BT * N, NFC * num_heads), out.shape

    ref = jax.block_until_ready(mhl_reference(roi_feature, image_feature, N, params))
    assert jnp.allclose(out, ref, rtol=2e-2, atol=2e-2), float(jnp.max(jnp.abs(out - ref)))

    print("KERNEL_OK")
</pallas_src>

<mosaic_0001>
module attributes {stable_mosaic.version = 11 : i64} {
  func.func @_matmul_bias_kernel(%arg0: i32, %arg1: memref<192x768xf32, #tpu.memory_space<vmem>>, %arg2: memref<768x256xf32, #tpu.memory_space<vmem>>, %arg3: memref<1x256xf32, #tpu.memory_space<vmem>>, %arg4: memref<192x256xf32, #tpu.memory_space<vmem>>) attributes {dimension_semantics = [#tpu.dimension_semantics<parallel>], iteration_bounds = array<i64: 1>, scalar_prefetch = 0 : i64, scratch_operands = 0 : i64, tpu.core_type = #tpu.core_type<tc>, window_params = [{transform_indices = @transform_0, window_bounds = array<i64: 192, 768>}, {pipeline_mode = #tpu.pipeline_mode<synchronous>, transform_indices = @transform_1, window_bounds = array<i64: 768, 256>}, {pipeline_mode = #tpu.pipeline_mode<synchronous>, transform_indices = @transform_2, window_bounds = array<i64: 1, 256>}, {transform_indices = @transform_3, window_bounds = array<i64: 192, 256>}]} {
    %c0 = arith.constant 0 : index
    %c0_0 = arith.constant 0 : index
    %0 = vector.load %arg1[%c0, %c0_0] : memref<192x768xf32, #tpu.memory_space<vmem>>, vector<192x768xf32>
    %c0_1 = arith.constant 0 : index
    %c0_2 = arith.constant 0 : index
    %1 = vector.load %arg2[%c0_1, %c0_2] : memref<768x256xf32, #tpu.memory_space<vmem>>, vector<768x256xf32>
    %cst = arith.constant dense<0.000000e+00> : vector<192x256xf32>
    %2 = tpu.matmul %0, %1, %cst {dimension_numbers = #tpu.dot_dimension_numbers<[1], [0], [0], [1], [0, 0, 1, 1], [], []>} : vector<192x768xf32>, vector<768x256xf32>, vector<192x256xf32> -> vector<192x256xf32>
    %c0_3 = arith.constant 0 : index
    %c0_4 = arith.constant 0 : index
    %3 = vector.load %arg3[%c0_3, %c0_4] : memref<1x256xf32, #tpu.memory_space<vmem>>, vector<1x256xf32>
    %4 = vector.broadcast %3 : vector<1x256xf32> to vector<192x256xf32>
    %5 = arith.addf %2, %4 : vector<192x256xf32>
    %c0_5 = arith.constant 0 : index
    %c0_6 = arith.constant 0 : index
    %6 = vector.load %arg4[%c0_5, %c0_6] : memref<192x256xf32, #tpu.memory_space<vmem>>, vector<192x256xf32>
    tpu.vector_store %arg4[%c0_5, %c0_6], %5 {strides = array<i32>} : memref<192x256xf32, #tpu.memory_space<vmem>>, vector<192x256xf32>,
    return
  }
  func.func @transform_0(%arg0: i32) -> (i32, i32) {
    %c0_i32 = arith.constant 0 : i32
    %c0_i32_0 = arith.constant 0 : i32
    return %arg0, %c0_i32 : i32, i32
  }
  func.func @transform_1(%arg0: i32) -> (i32, i32) {
    %c0_i32 = arith.constant 0 : i32
    %c0_i32_0 = arith.constant 0 : i32
    %c0_i32_1 = arith.constant 0 : i32
    return %c0_i32, %c0_i32_0 : i32, i32
  }
  func.func @transform_2(%arg0: i32) -> (i32, i32) {
    %c0_i32 = arith.constant 0 : i32
    %c0_i32_0 = arith.constant 0 : i32
    %c0_i32_1 = arith.constant 0 : i32
    return %c0_i32, %c0_i32_0 : i32, i32
  }
  func.func @transform_3(%arg0: i32) -> (i32, i32) {
    %c0_i32 = arith.constant 0 : i32
    %c0_i32_0 = arith.constant 0 : i32
    return %arg0, %c0_i32 : i32, i32
  }
}

</mosaic_0001>

<llo_original>
// kernel: tpu_custom_call.1
$region0: #{tpu_custom_call.1}
  #allocation0 [shape = 'u32[]', space=smem, size = 0x4, offset = 0x4, fixed_abs, tag = 'smem constant byte address 0x4 - core index']
  #allocation1 [shape = 'u32[144,128]{1,0:T(1,128)}', space=vmem, size = 0x12000, scoped, tag = 'internal scratch']
  %s0 = inlined_call_operand.hbm [shape: f32[192,768], index: 0, kind: input, shape index: {}]
  %s1 = inlined_call_operand.hbm [shape: f32[768,256], index: 1, kind: input, shape index: {}]
  %s2 = inlined_call_operand.vmem [shape: f32[1,256], index: 2, kind: input, shape index: {}]
  %s3 = inlined_call_operand.hbm [shape: f32[192,256], index: 3, kind: output, shape index: {}]
  %s4 = sld [smem:[#allocation0]]
  $region30: #{tpu_custom_call.1} parent=0
    _
  %s6 = ssub.s32 1, %s4
  %s7 = scalar_select 0, %s6, %s4
  $region1: #{tpu_custom_call.1} parent=0
    #allocation2 [shape = 'u8[589824]{0}', space=vmem, size = 0x90000, scoped, tag = 'input window, operand 0, single buffered']
    #allocation3 [shape = 's32[1]{0}', space=sflag, size = 0x4, scoped, tag = 'scoped memory for tpu_custom_call.1']
    #allocation4 [shape = 's32[1]{0}', space=sflag, size = 0x4, scoped, tag = 'scoped memory for tpu_custom_call.1']
    #allocation5 [shape = 'u8[786432]{0}', space=vmem, size = 0xc0000, scoped, tag = 'input window, operand 1, single buffered']
    #allocation6 [shape = 's32[1]{0}', space=sflag, size = 0x4, scoped, tag = 'scoped memory for tpu_custom_call.1']
    #allocation7 [shape = 'u8[196608]{0}', space=vmem, size = 0x30000, scoped, tag = 'output window, operand 0, single buffered']
    %8 = vsyncpa [#allocation3], 0
    %9 = vsyncpa [#allocation6], 0
    %10 = vsyncpa [#allocation4], 0
    // Predicated region
    $region2: #{tpu_custom_call.1} parent=1 // pred_check
      _
    $region3: #{tpu_custom_call.1} parent=1 // pred_check_branch
      %12 = sbr.rel (0) target = $region5
    $region4: #{tpu_custom_call.1} parent=1 // pred_region
      %s14 = ssub.s32 18432, 18432
      %15 = vsyncadd [#allocation3], %s14
      %s16 = sshll.u32 [#allocation2], 4
      %s17 = int_to_ptr.vmem [resolvable:$true] %s16
      %22 = dma.hbm_to_vmem [thread:$0]  %s0, 18432, %s17, [#allocation3], 768, 768, 48
    $region5: #{tpu_custom_call.1} parent=1 // pred_fallthru
      _
    // Predicated region
    $region6: #{tpu_custom_call.1} parent=1 // pred_check
      _
    $region7: #{tpu_custom_call.1} parent=1 // pred_check_branch
      %24 = sbr.rel (0) target = $region9
    $region8: #{tpu_custom_call.1} parent=1 // pred_region
      %s26 = ssub.s32 24576, 24576
      %27 = vsyncadd [#allocation6], %s26
      %s28 = sshll.u32 [#allocation5], 4
      %s29 = int_to_ptr.vmem [resolvable:$true] %s28
      %34 = dma.hbm_to_vmem [thread:$0]  %s1, 24576, %s29, [#allocation6], 256, 256, 16
    $region9: #{tpu_custom_call.1} parent=1 // pred_fallthru
      _
    // Predicated region
    $region10: #{tpu_custom_call.1} parent=1 // pred_check
      _
    $region11: #{tpu_custom_call.1} parent=1 // pred_check_branch
      %36 = sbr.rel (0) target = $region13
    $region12: #{tpu_custom_call.1} parent=1 // pred_region
      _
    $region13: #{tpu_custom_call.1} parent=1 // pred_fallthru
      _
    // Predicated region
    $region14: #{tpu_custom_call.1} parent=1 // pred_check
      _
    $region15: #{tpu_custom_call.1} parent=1 // pred_check_branch
      %38 = sbr.rel (0) target = $region17
    $region16: #{tpu_custom_call.1} parent=1 // pred_region
      %39 = dma.done [#allocation3], 18432
    $region17: #{tpu_custom_call.1} parent=1 // pred_fallthru
      _
    // Predicated region
    $region18: #{tpu_custom_call.1} parent=1 // pred_check
      _
    $region19: #{tpu_custom_call.1} parent=1 // pred_check_branch
      %41 = sbr.rel (0) target = $region21
    $region20: #{tpu_custom_call.1} parent=1 // pred_region
      %42 = dma.done [#allocation6], 24576
    $region21: #{tpu_custom_call.1} parent=1 // pred_fallthru
      _
    %v43 = vld [vmem:[#allocation2] sm:$0xff]
    %v44 = vld [vmem:[#allocation2 + $0x8] sm:$0xff]
    %v45 = vld [vmem:[#allocation2 + $0x10] sm:$0xff]
    %v46 = vld [vmem:[#allocation2 + $0x18] sm:$0xff]
    %v47 = vld [vmem:[#allocation2 + $0x20] sm:$0xff]
    %v48 = vld [vmem:[#allocation2 + $0x28] sm:$0xff]
    %v49 = vld [vmem:[#allocation2 + $0x30] sm:$0xff]
    %v50 = vld [vmem:[#allocation2 + $0x38] sm:$0xff]
    %v51 = vld [vmem:[#allocation2 + $0x40] sm:$0xff]
    %v52 = vld [vmem:[#allocation2 + $0x48] sm:$0xff]
    %v53 = vld [vmem:[#allocation2 + $0x50] sm:$0xff]
    %v54 = vld [vmem:[#allocation2 + $0x58] sm:$0xff]
    %v55 = vld [vmem:[#allocation2 + $0x60] sm:$0xff]
    %v56 = vld [vmem:[#allocation2 + $0x68] sm:$0xff]
    %v57 = vld [vmem:[#allocation2 + $0x70] sm:$0xff]
    %v58 = vld [vmem:[#allocation2 + $0x78] sm:$0xff]
    %v59 = vld [vmem:[#allocation2 + $0x80] sm:$0xff]
    %v60 = vld [vmem:[#allocation2 + $0x88] sm:$0xff]
    %v61 = vld [vmem:[#allocation2 + $0x90] sm:$0xff]
    %v62 = vld [vmem:[#allocation2 + $0x98] sm:$0xff]
    %v63 = vld [vmem:[#allocation2 + $0xa0] sm:$0xff]
    %v64 = vld [vmem:[#allocation2 + $0xa8] sm:$0xff]
    %v65 = vld [vmem:[#allocation2 + $0xb0] sm:$0xff]
    %v66 = vld [vmem:[#allocation2 + $0xb8] sm:$0xff]
    %v67 = vld [vmem:[#allocation2 + $0xc0] sm:$0xff]
    %v68 = vld [vmem:[#allocation2 + $0xc8] sm:$0xff]
    %v69 = vld [vmem:[#allocation2 + $0xd0] sm:$0xff]
    %v70 = vld [vmem:[#allocation2 + $0xd8] sm:$0xff]
    %v71 = vld [vmem:[#allocation2 + $0xe0] sm:$0xff]
    %v72 = vld [vmem:[#allocation2 + $0xe8] sm:$0xff]
    %v73 = vld [vmem:[#allocation2 + $0xf0] sm:$0xff]
    %v74 = vld [vmem:[#allocation2 + $0xf8] sm:$0xff]
    %v75 = vld [vmem:[#allocation2 + $0x100] sm:$0xff]
    %v76 = vld [vmem:[#allocation2 + $0x108] sm:$0xff]
    %v77 = vld [vmem:[#allocation2 + $0x110] sm:$0xff]
    %v78 = vld [vmem:[#allocation2 + $0x118] sm:$0xff]
    %v79 = vld [vmem:[#allocation2 + $0x120] sm:$0xff]
    %v80 = vld [vmem:[#allocation2 + $0x128] sm:$0xff]
    %v81 = vld [vmem:[#allocation2 + $0x130] sm:$0xff]
    %v82 = vld [vmem:[#allocation2 + $0x138] sm:$0xff]
    %v83 = vld [vmem:[#allocation2 + $0x140] sm:$0xff]
    %v84 = vld [vmem:[#allocation2 + $0x148] sm:$0xff]
    %v85 = vld [vmem:[#allocation2 + $0x150] sm:$0xff]
    %v86 = vld [vmem:[#allocation2 + $0x158] sm:$0xff]
    %v87 = vld [vmem:[#allocation2 + $0x160] sm:$0xff]
    %v88 = vld [vmem:[#allocation2 + $0x168] sm:$0xff]
    %v89 = vld [vmem:[#allocation2 + $0x170] sm:$0xff]
    %v90 = vld [vmem:[#allocation2 + $0x178] sm:$0xff]
    %v91 = vld [vmem:[#allocation2 + $0x180] sm:$0xff]
    %v92 = vld [vmem:[#allocation2 + $0x188] sm:$0xff]
    %v93 = vld [vmem:[#allocation2 + $0x190] sm:$0xff]
    %v94 = vld [vmem:[#allocation2 + $0x198] sm:$0xff]
    %v95 = vld [vmem:[#allocation2 + $0x1a0] sm:$0xff]
    %v96 = vld [vmem:[#allocation2 + $0x1a8] sm:$0xff]
    %v97 = vld [vmem:[#allocation2 + $0x1b0] sm:$0xff]
    %v98 = vld [vmem:[#allocation2 + $0x1b8] sm:$0xff]
    %v99 = vld [vmem:[#allocation2 + $0x1c0] sm:$0xff]
    %v100 = vld [vmem:[#allocation2 + $0x1c8] sm:$0xff]
    %v101 = vld [vmem:[#allocation2 + $0x1d0] sm:$0xff]
    %v102 = vld [vmem:[#allocation2 + $0x1d8] sm:$0xff]
    %v103 = vld [vmem:[#allocation2 + $0x1e0] sm:$0xff]
    %v104 = vld [vmem:[#allocation2 + $0x1e8] sm:$0xff]
    %v105 = vld [vmem:[#allocation2 + $0x1f0] sm:$0xff]
    %v106 = vld [vmem:[#allocation2 + $0x1f8] sm:$0xff]
    %v107 = vld [vmem:[#allocation2 + $0x200] sm:$0xff]
    %v108 = vld [vmem:[#allocation2 + $0x208] sm:$0xff]
    %v109 = vld [vmem:[#allocation2 + $0x210] sm:$0xff]
    %v110 = vld [vmem:[#allocation2 + $0x218] sm:$0xff]
    %v111 = vld [vmem:[#allocation2 + $0x220] sm:$0xff]
    %v112 = vld [vmem:[#allocation2 + $0x228] sm:$0xff]
    %v113 = vld [vmem:[#allocation2 + $0x230] sm:$0xff]
    %v114 = vld [vmem:[#allocation2 + $0x238] sm:$0xff]
    %v115 = vld [vmem:[#allocation2 + $0x240] sm:$0xff]
    %v116 = vld [vmem:[#allocation2 + $0x248] sm:$0xff]
    %v117 = vld [vmem:[#allocation2 + $0x250] sm:$0xff]
    %v118 = vld [vmem:[#allocation2 + $0x258] sm:$0xff]
    %v119 = vld [vmem:[#allocation2 + $0x260] sm:$0xff]
    %v120 = vld [vmem:[#allocation2 + $0x268] sm:$0xff]
    %v121 = vld [vmem:[#allocation2 + $0x270] sm:$0xff]
    %v122 = vld [vmem:[#allocation2 + $0x278] sm:$0xff]
    %v123 = vld [vmem:[#allocation2 + $0x280] sm:$0xff]
    %v124 = vld [vmem:[#allocation2 + $0x288] sm:$0xff]
    %v125 = vld [vmem:[#allocation2 + $0x290] sm:$0xff]
    %v126 = vld [vmem:[#allocation2 + $0x298] sm:$0xff]
    %v127 = vld [vmem:[#allocation2 + $0x2a0] sm:$0xff]
    %v128 = vld [vmem:[#allocation2 + $0x2a8] sm:$0xff]
    %v129 = vld [vmem:[#allocation2 + $0x2b0] sm:$0xff]
    %v130 = vld [vmem:[#allocation2 + $0x2b8] sm:$0xff]
    %v131 = vld [vmem:[#allocation2 + $0x2c0] sm:$0xff]
    %v132 = vld [vmem:[#allocation2 + $0x2c8] sm:$0xff]
    %v133 = vld [vmem:[#allocation2 + $0x2d0] sm:$0xff]
    %v134 = vld [vmem:[#allocation2 + $0x2d8] sm:$0xff]
    %v135 = vld [vmem:[#allocation2 + $0x2e0] sm:$0xff]
    %v136 = vld [vmem:[#allocation2 + $0x2e8] sm:$0xff]
    %v137 = vld [vmem:[#allocation2 + $0x2f0] sm:$0xff]
    %v138 = vld [vmem:[#allocation2 + $0x2f8] sm:$0xff]
    %v139 = vld [vmem:[#allocation2 + $0x300] sm:$0xff]
    %v140 = vld [vmem:[#allocation2 + $0x308] sm:$0xff]
    %v141 = vld [vmem:[#allocation2 + $0x310] sm:$0xff]
    %v142 = vld [vmem:[#allocation2 + $0x318] sm:$0xff]
    %v143 = vld [vmem:[#allocation2 + $0x320] sm:$0xff]
    %v144 = vld [vmem:[#allocation2 + $0x328] sm:$0xff]
    %v145 = vld [vmem:[#allocation2 + $0x330] sm:$0xff]
    %v146 = vld [vmem:[#allocation2 + $0x338] sm:$0xff]
    %v147 = vld [vmem:[#allocation2 + $0x340] sm:$0xff]
    %v148 = vld [vmem:[#allocation2 + $0x348] sm:$0xff]
    %v149 = vld [vmem:[#allocation2 + $0x350] sm:$0xff]
    %v150 = vld [vmem:[#allocation2 + $0x358] sm:$0xff]
    %v151 = vld [vmem:[#allocation2 + $0x360] sm:$0xff]
    %v152 = vld [vmem:[#allocation2 + $0x368] sm:$0xff]
    %v153 = vld [vmem:[#allocation2 + $0x370] sm:$0xff]
    %v154 = vld [vmem:[#allocation2 + $0x378] sm:$0xff]
    %v155 = vld [vmem:[#allocation2 + $0x380] sm:$0xff]
    %v156 = vld [vmem:[#allocation2 + $0x388] sm:$0xff]
    %v157 = vld [vmem:[#allocation2 + $0x390] sm:$0xff]
    %v158 = vld [vmem:[#allocation2 + $0x398] sm:$0xff]
    %v159 = vld [vmem:[#allocation2 + $0x3a0] sm:$0xff]
    %v160 = vld [vmem:[#allocation2 + $0x3a8] sm:$0xff]
    %v161 = vld [vmem:[#allocation2 + $0x3b0] sm:$0xff]
    %v162 = vld [vmem:[#allocation2 + $0x3b8] sm:$0xff]
    %v163 = vld [vmem:[#allocation2 + $0x3c0] sm:$0xff]
    %v164 = vld [vmem:[#allocation2 + $0x3c8] sm:$0xff]
    %v165 = vld [vmem:[#allocation2 + $0x3d0] sm:$0xff]
    %v166 = vld [vmem:[#allocation2 + $0x3d8] sm:$0xff]
    %v167 = vld [vmem:[#allocation2 + $0x3e0] sm:$0xff]
    %v168 = vld [vmem:[#allocation2 + $0x3e8] sm:$0xff]
    %v169 = vld [vmem:[#allocation2 + $0x3f0] sm:$0xff]
    %v170 = vld [vmem:[#allocation2 + $0x3f8] sm:$0xff]
    %v171 = vld [vmem:[#allocation2 + $0x400] sm:$0xff]
    %v172 = vld [vmem:[#allocation2 + $0x408] sm:$0xff]
    %v173 = vld [vmem:[#allocation2 + $0x410] sm:$0xff]
    %v174 = vld [vmem:[#allocation2 + $0x418] sm:$0xff]
    %v175 = vld [vmem:[#allocation2 + $0x420] sm:$0xff]
    %v176 = vld [vmem:[#allocation2 + $0x428] sm:$0xff]
    %v177 = vld [vmem:[#allocation2 + $0x430] sm:$0xff]
    %v178 = vld [vmem:[#allocation2 + $0x438] sm:$0xff]
    %v179 = vld [vmem:[#allocation2 + $0x440] sm:$0xff]
    %v180 = vld [vmem:[#allocation2 + $0x448] sm:$0xff]
    %v181 = vld [vmem:[#allocation2 + $0x450] sm:$0xff]
    %v182 = vld [vmem:[#allocation2 + $0x458] sm:$0xff]
    %v183 = vld [vmem:[#allocation2 + $0x460] sm:$0xff]
    %v184 = vld [vmem:[#allocation2 + $0x468] sm:$0xff]
    %v185 = vld [vmem:[#allocation2 + $0x470] sm:$0xff]
    %v186 = vld [vmem:[#allocation2 + $0x478] sm:$0xff]
    %v187 = vld [vmem:[#allocation5] sm:$0xff]
    %v188 = vld [vmem:[#allocation5 + $0x8] sm:$0xff]
    %v189 = vld [vmem:[#allocation5 + $0x10] sm:$0xff]
    %v190 = vld [vmem:[#allocation5 + $0x18] sm:$0xff]
    %v191 = vld [vmem:[#allocation5 + $0x20] sm:$0xff]
    %v192 = vld [vmem:[#allocation5 + $0x28] sm:$0xff]
    %v193 = vld [vmem:[#allocation5 + $0x30] sm:$0xff]
    %v194 = vld [vmem:[#allocation5 + $0x38] sm:$0xff]
    %v195 = vld [vmem:[#allocation5 + $0x40] sm:$0xff]
    %v196 = vld [vmem:[#allocation5 + $0x48] sm:$0xff]
    %v197 = vld [vmem:[#allocation5 + $0x50] sm:$0xff]
    %v198 = vld [vmem:[#allocation5 + $0x58] sm:$0xff]
    %v199 = vld [vmem:[#allocation5 + $0x60] sm:$0xff]
    %v200 = vld [vmem:[#allocation5 + $0x68] sm:$0xff]
    %v201 = vld [vmem:[#allocation5 + $0x70] sm:$0xff]
    %v202 = vld [vmem:[#allocation5 + $0x78] sm:$0xff]
    %v203 = vld [vmem:[#allocation5 + $0x80] sm:$0xff]
    %v204 = vld [vmem:[#allocation5 + $0x88] sm:$0xff]
    %v205 = vld [vmem:[#allocation5 + $0x90] sm:$0xff]
    %v206 = vld [vmem:[#allocation5 + $0x98] sm:$0xff]
    %v207 = vld [vmem:[#allocation5 + $0xa0] sm:$0xff]
    %v208 = vld [vmem:[#allocation5 + $0xa8] sm:$0xff]
    %v209 = vld [vmem:[#allocation5 + $0xb0] sm:$0xff]
    %v210 = vld [vmem:[#allocation5 + $0xb8] sm:$0xff]
    %v211 = vld [vmem:[#allocation5 + $0xc0] sm:$0xff]
    %v212 = vld [vmem:[#allocation5 + $0xc8] sm:$0xff]
    %v213 = vld [vmem:[#allocation5 + $0xd0] sm:$0xff]
    %v214 = vld [vmem:[#allocation5 + $0xd8] sm:$0xff]
    %v215 = vld [vmem:[#allocation5 + $0xe0] sm:$0xff]
    %v216 = vld [vmem:[#allocation5 + $0xe8] sm:$0xff]
    %v217 = vld [vmem:[#allocation5 + $0xf0] sm:$0xff]
    %v218 = vld [vmem:[#allocation5 + $0xf8] sm:$0xff]
    %v219 = vld [vmem:[#allocation5 + $0x100] sm:$0xff]
    %v220 = vld [vmem:[#allocation5 + $0x108] sm:$0xff]
    %v221 = vld [vmem:[#allocation5 + $0x110] sm:$0xff]
    %v222 = vld [vmem:[#allocation5 + $0x118] sm:$0xff]
    %v223 = vld [vmem:[#allocation5 + $0x120] sm:$0xff]
    %v224 = vld [vmem:[#allocation5 + $0x128] sm:$0xff]
    %v225 = vld [vmem:[#allocation5 + $0x130] sm:$0xff]
    %v226 = vld [vmem:[#allocation5 + $0x138] sm:$0xff]
    %v227 = vld [vmem:[#allocation5 + $0x140] sm:$0xff]
    %v228 = vld [vmem:[#allocation5 + $0x148] sm:$0xff]
    %v229 = vld [vmem:[#allocation5 + $0x150] sm:$0xff]
    %v230 = vld [vmem:[#allocation5 + $0x158] sm:$0xff]
    %v231 = vld [vmem:[#allocation5 + $0x160] sm:$0xff]
    %v232 = vld [vmem:[#allocation5 + $0x168] sm:$0xff]
    %v233 = vld [vmem:[#allocation5 + $0x170] sm:$0xff]
    %v234 = vld [vmem:[#allocation5 + $0x178] sm:$0xff]
    %v235 = vld [vmem:[#allocation5 + $0x180] sm:$0xff]
    %v236 = vld [vmem:[#allocation5 + $0x188] sm:$0xff]
    %v237 = vld [vmem:[#allocation5 + $0x190] sm:$0xff]
    %v238 = vld [vmem:[#allocation5 + $0x198] sm:$0xff]
    %v239 = vld [vmem:[#allocation5 + $0x1a0] sm:$0xff]
    %v240 = vld [vmem:[#allocation5 + $0x1a8] sm:$0xff]
    %v241 = vld [vmem:[#allocation5 + $0x1b0] sm:$0xff]
    %v242 = vld [vmem:[#allocation5 + $0x1b8] sm:$0xff]
    %v243 = vld [vmem:[#allocation5 + $0x1c0] sm:$0xff]
    %v244 = vld [vmem:[#allocation5 + $0x1c8] sm:$0xff]
    %v245 = vld [vmem:[#allocation5 + $0x1d0] sm:$0xff]
    %v246 = vld [vmem:[#allocation5 + $0x1d8] sm:$0xff]
    %v247 = vld [vmem:[#allocation5 + $0x1e0] sm:$0xff]
    %v248 = vld [vmem:[#allocation5 + $0x1e8] sm:$0xff]
    %v249 = vld [vmem:[#allocation5 + $0x1f0] sm:$0xff]
    %v250 = vld [vmem:[#allocation5 + $0x1f8] sm:$0xff]
    %v251 = vld [vmem:[#allocation5 + $0x200] sm:$0xff]
    %v252 = vld [vmem:[#allocation5 + $0x208] sm:$0xff]
    %v253 = vld [vmem:[#allocation5 + $0x210] sm:$0xff]
    %v254 = vld [vmem:[#allocation5 + $0x218] sm:$0xff]
    %v255 = vld [vmem:[#allocation5 + $0x220] sm:$0xff]
    %v256 = vld [vmem:[#allocation5 + $0x228] sm:$0xff]
    %v257 = vld [vmem:[#allocation5 + $0x230] sm:$0xff]
    %v258 = vld [vmem:[#allocation5 + $0x238] sm:$0xff]
    %v259 = vld [vmem:[#allocation5 + $0x240] sm:$0xff]
    %v260 = vld [vmem:[#allocation5 + $0x248] sm:$0xff]
    %v261 = vld [vmem:[#allocation5 + $0x250] sm:$0xff]
    %v262 = vld [vmem:[#allocation5 + $0x258] sm:$0xff]
    %v263 = vld [vmem:[#allocation5 + $0x260] sm:$0xff]
    %v264 = vld [vmem:[#allocation5 + $0x268] sm:$0xff]
    %v265 = vld [vmem:[#allocation5 + $0x270] sm:$0xff]
    %v266 = vld [vmem:[#allocation5 + $0x278] sm:$0xff]
    %v267 = vld [vmem:[#allocation5 + $0x280] sm:$0xff]
    %v268 = vld [vmem:[#allocation5 + $0x288] sm:$0xff]
    %v269 = vld [vmem:[#allocation5 + $0x290] sm:$0xff]
    %v270 = vld [vmem:[#allocation5 + $0x298] sm:$0xff]
    %v271 = vld [vmem:[#allocation5 + $0x2a0] sm:$0xff]
    %v272 = vld [vmem:[#allocation5 + $0x2a8] sm:$0xff]
    %v273 = vld [vmem:[#allocation5 + $0x2b0] sm:$0xff]
    %v274 = vld [vmem:[#allocation5 + $0x2b8] sm:$0xff]
    %v275 = vld [vmem:[#allocation5 + $0x2c0] sm:$0xff]
    %v276 = vld [vmem:[#allocation5 + $0x2c8] sm:$0xff]
    %v277 = vld [vmem:[#allocation5 + $0x2d0] sm:$0xff]
    %v278 = vld [vmem:[#allocation5 + $0x2d8] sm:$0xff]
    %v279 = vld [vmem:[#allocation5 + $0x2e0] sm:$0xff]
    %v280 = vld [vmem:[#allocation5 + $0x2e8] sm:$0xff]
    %v281 = vld [vmem:[#allocation5 + $0x2f0] sm:$0xff]
    %v282 = vld [vmem:[#allocation5 + $0x2f8] sm:$0xff]
    %v283 = vld [vmem:[#allocation5 + $0x300] sm:$0xff]
    %v284 = vld [vmem:[#allocation5 + $0x308] sm:$0xff]
    %v285 = vld [vmem:[#allocation5 + $0x310] sm:$0xff]
    %v286 = vld [vmem:[#allocation5 + $0x318] sm:$0xff]
    %v287 = vld [vmem:[#allocation5 + $0x320] sm:$0xff]
    %v288 = vld [vmem:[#allocation5 + $0x328] sm:$0xff]
    %v289 = vld [vmem:[#allocation5 + $0x330] sm:$0xff]
    %v290 = vld [vmem:[#allocation5 + $0x338] sm:$0xff]
    %v291 = vld [vmem:[#allocation5 + $0x340] sm:$0xff]
    %v292 = vld [vmem:[#allocation5 + $0x348] sm:$0xff]
    %v293 = vld [vmem:[#allocation5 + $0x350] sm:$0xff]
    %v294 = vld [vmem:[#allocation5 + $0x358] sm:$0xff]
    %v295 = vld [vmem:[#allocation5 + $0x360] sm:$0xff]
    %v296 = vld [vmem:[#allocation5 + $0x368] sm:$0xff]
    %v297 = vld [vmem:[#allocation5 + $0x370] sm:$0xff]
    %v298 = vld [vmem:[#allocation5 + $0x378] sm:$0xff]
    %v299 = vld [vmem:[#allocation5 + $0x380] sm:$0xff]
    %v300 = vld [vmem:[#allocation5 + $0x388] sm:$0xff]
    %v301 = vld [vmem:[#allocation5 + $0x390] sm:$0xff]
    %v302 = vld [vmem:[#allocation5 + $0x398] sm:$0xff]
    %v303 = vld [vmem:[#allocation5 + $0x3a0] sm:$0xff]
    %v304 = vld [vmem:[#allocation5 + $0x3a8] sm:$0xff]
    %v305 = vld [vmem:[#allocation5 + $0x3b0] sm:$0xff]
    %v306 = vld [vmem:[#allocation5 + $0x3b8] sm:$0xff]
    %v307 = vld [vmem:[#allocation5 + $0x3c0] sm:$0xff]
    %v308 = vld [vmem:[#allocation5 + $0x3c8] sm:$0xff]
    %v309 = vld [vmem:[#allocation5 + $0x3d0] sm:$0xff]
    %v310 = vld [vmem:[#allocation5 + $0x3d8] sm:$0xff]
    %v311 = vld [vmem:[#allocation5 + $0x3e0] sm:$0xff]
    %v312 = vld [vmem:[#allocation5 + $0x3e8] sm:$0xff]
    %v313 = vld [vmem:[#allocation5 + $0x3f0] sm:$0xff]
    %v314 = vld [vmem:[#allocation5 + $0x3f8] sm:$0xff]
    %v315 = vld [vmem:[#allocation5 + $0x400] sm:$0xff]
    %v316 = vld [vmem:[#allocation5 + $0x408] sm:$0xff]
    %v317 = vld [vmem:[#allocation5 + $0x410] sm:$0xff]
    %v318 = vld [vmem:[#allocation5 + $0x418] sm:$0xff]
    %v319 = vld [vmem:[#allocation5 + $0x420] sm:$0xff]
    %v320 = vld [vmem:[#allocation5 + $0x428] sm:$0xff]
    %v321 = vld [vmem:[#allocation5 + $0x430] sm:$0xff]
    %v322 = vld [vmem:[#allocation5 + $0x438] sm:$0xff]
    %v323 = vld [vmem:[#allocation5 + $0x440] sm:$0xff]
    %v324 = vld [vmem:[#allocation5 + $0x448] sm:$0xff]
    %v325 = vld [vmem:[#allocation5 + $0x450] sm:$0xff]
    %v326 = vld [vmem:[#allocation5 + $0x458] sm:$0xff]
    %v327 = vld [vmem:[#allocation5 + $0x460] sm:$0xff]
    %v328 = vld [vmem:[#allocation5 + $0x468] sm:$0xff]
    %v329 = vld [vmem:[#allocation5 + $0x470] sm:$0xff]
    %v330 = vld [vmem:[#allocation5 + $0x478] sm:$0xff]
    %v331 = vld [vmem:[#allocation5 + $0x480] sm:$0xff]
    %v332 = vld [vmem:[#allocation5 + $0x488] sm:$0xff]
    %v333 = vld [vmem:[#allocation5 + $0x490] sm:$0xff]
    %v334 = vld [vmem:[#allocation5 + $0x498] sm:$0xff]
    %v335 = vld [vmem:[#allocation5 + $0x4a0] sm:$0xff]
    %v336 = vld [vmem:[#allocation5 + $0x4a8] sm:$0xff]
    %v337 = vld [vmem:[#allocation5 + $0x4b0] sm:$0xff]
    %v338 = vld [vmem:[#allocation5 + $0x4b8] sm:$0xff]
    %v339 = vld [vmem:[#allocation5 + $0x4c0] sm:$0xff]
    %v340 = vld [vmem:[#allocation5 + $0x4c8] sm:$0xff]
    %v341 = vld [vmem:[#allocation5 + $0x4d0] sm:$0xff]
    %v342 = vld [vmem:[#allocation5 + $0x4d8] sm:$0xff]
    %v343 = vld [vmem:[#allocation5 + $0x4e0] sm:$0xff]
    %v344 = vld [vmem:[#allocation5 + $0x4e8] sm:$0xff]
    %v345 = vld [vmem:[#allocation5 + $0x4f0] sm:$0xff]
    %v346 = vld [vmem:[#allocation5 + $0x4f8] sm:$0xff]
    %v347 = vld [vmem:[#allocation5 + $0x500] sm:$0xff]
    %v348 = vld [vmem:[#allocation5 + $0x508] sm:$0xff]
    %v349 = vld [vmem:[#allocation5 + $0x510] sm:$0xff]
    %v350 = vld [vmem:[#allocation5 + $0x518] sm:$0xff]
    %v351 = vld [vmem:[#allocation5 + $0x520] sm:$0xff]
    %v352 = vld [vmem:[#allocation5 + $0x528] sm:$0xff]
    %v353 = vld [vmem:[#allocation5 + $0x530] sm:$0xff]
    %v354 = vld [vmem:[#allocation5 + $0x538] sm:$0xff]
    %v355 = vld [vmem:[#allocation5 + $0x540] sm:$0xff]
    %v356 = vld [vmem:[#allocation5 + $0x548] sm:$0xff]
    %v357 = vld [vmem:[#allocation5 + $0x550] sm:$0xff]
    %v358 = vld [vmem:[#allocation5 + $0x558] sm:$0xff]
    %v359 = vld [vmem:[#allocation5 + $0x560] sm:$0xff]
    %v360 = vld [vmem:[#allocation5 + $0x568] sm:$0xff]
    %v361 = vld [vmem:[#allocation5 + $0x570] sm:$0xff]
    %v362 = vld [vmem:[#allocation5 + $0x578] sm:$0xff]
    %v363 = vld [vmem:[#allocation5 + $0x580] sm:$0xff]
    %v364 = vld [vmem:[#allocation5 + $0x588] sm:$0xff]
    %v365 = vld [vmem:[#allocation5 + $0x590] sm:$0xff]
    %v366 = vld [vmem:[#allocation5 + $0x598] sm:$0xff]
    %v367 = vld [vmem:[#allocation5 + $0x5a0] sm:$0xff]
    %v368 = vld [vmem:[#allocation5 + $0x5a8] sm:$0xff]
    %v369 = vld [vmem:[#allocation5 + $0x5b0] sm:$0xff]
    %v370 = vld [vmem:[#allocation5 + $0x5b8] sm:$0xff]
    %v371 = vld [vmem:[#allocation5 + $0x5c0] sm:$0xff]
    %v372 = vld [vmem:[#allocation5 + $0x5c8] sm:$0xff]
    %v373 = vld [vmem:[#allocation5 + $0x5d0] sm:$0xff]
    %v374 = vld [vmem:[#allocation5 + $0x5d8] sm:$0xff]
    %v375 = vld [vmem:[#allocation5 + $0x5e0] sm:$0xff]
    %v376 = vld [vmem:[#allocation5 + $0x5e8] sm:$0xff]
    %v377 = vld [vmem:[#allocation5 + $0x5f0] sm:$0xff]
    %v378 = vld [vmem:[#allocation5 + $0x5f8] sm:$0xff]
    %v379 = vld [vmem:[%s2] sm:$0x3]
    %v381 = vlaneseq
    %v382 = vshrl.u32 %v381, 7
    %v383 = vsub.s32 0, %v382
    %v384 = vrot.slane %v379, %v383
    %v385 = vlaneseq
    %v386 = vshrl.u32 %v385, 7
    %v387 = vsub.s32 1, %v386
    %v388 = vrot.slane %v379, %v387
    %391 = vmatprep.subr.mxu0 %v188
    %392 = vmatpush1.msra.mxu0 %v187
    %393 = vmatprep.subr.mxu0 %v190
    %394 = vmatpush1.msra.mxu0 %v189
    %395 = vmatprep.subr.mxu0 %v192
    %396 = vmatpush1.msra.mxu0 %v191
    %397 = vmatprep.subr.mxu0 %v194
    %398 = vmatpush1.msra.mxu0 %v193
    %399 = vmatprep.subr.mxu0 %v196
    %400 = vmatpush1.msra.mxu0 %v195
    %401 = vmatprep.subr.mxu0 %v198
    %402 = vmatpush1.msra.mxu0 %v197
    %403 = vmatprep.subr.mxu0 %v200
    %404 = vmatpush1.msra.mxu0 %v199
    %405 = vmatprep.subr.mxu0 %v202
    %406 = vmatpush1.msra.mxu0 %v201
    %407 = vmatprep.subr.mxu0 %v204
    %408 = vmatpush1.msra.mxu0 %v203
    %409 = vmatprep.subr.mxu0 %v206
    %410 = vmatpush1.msra.mxu0 %v205
    %411 = vmatprep.subr.mxu0 %v208
    %412 = vmatpush1.msra.mxu0 %v207
    %413 = vmatprep.subr.mxu0 %v210
    %414 = vmatpush1.msra.mxu0 %v209
    %415 = vmatprep.subr.mxu0 %v212
    %416 = vmatpush1.msra.mxu0 %v211
    %417 = vmatprep.subr.mxu0 %v214
    %418 = vmatpush1.msra.mxu0 %v213
    %419 = vmatprep.subr.mxu0 %v216
    %420 = vmatpush1.msra.mxu0 %v215
    %421 = vmatprep.subr.mxu0 %v218
    %422 = vmatpush1.msra.mxu0 %v217
    %423 = vmatprep.subr.mxu0 %v220
    %424 = vmatpush1.msra.mxu0 %v219
    %425 = vmatprep.subr.mxu0 %v222
    %426 = vmatpush1.msra.mxu0 %v221
    %427 = vmatprep.subr.mxu0 %v224
    %428 = vmatpush1.msra.mxu0 %v223
    %429 = vmatprep.subr.mxu0 %v226
    %430 = vmatpush1.msra.mxu0 %v225
    %431 = vmatprep.subr.mxu0 %v228
    %432 = vmatpush1.msra.mxu0 %v227
    %433 = vmatprep.subr.mxu0 %v230
    %434 = vmatpush1.msra.mxu0 %v229
    %435 = vmatprep.subr.mxu0 %v232
    %436 = vmatpush1.msra.mxu0 %v231
    %437 = vmatprep.subr.mxu0 %v234
    %438 = vmatpush1.msra.mxu0 %v233
    %439 = vmatprep.subr.mxu0 %v236
    %440 = vmatpush1.msra.mxu0 %v235
    %441 = vmatprep.subr.mxu0 %v238
    %442 = vmatpush1.msra.mxu0 %v237
    %443 = vmatprep.subr.mxu0 %v240
    %444 = vmatpush1.msra.mxu0 %v239
    %445 = vmatprep.subr.mxu0 %v242
    %446 = vmatpush1.msra.mxu0 %v241
    %447 = vmatprep.subr.mxu0 %v244
    %448 = vmatpush1.msra.mxu0 %v243
    %449 = vmatprep.subr.mxu0 %v246
    %450 = vmatpush1.msra.mxu0 %v245
    %451 = vmatprep.subr.mxu0 %v248
    %452 = vmatpush1.msra.mxu0 %v247
    %453 = vmatprep.subr.mxu0 %v250
    %454 = vmatpush1.msra.mxu0 %v249
    %455 = vmatprep.mubr.f32.mxu0 %v44
    %456 = vmatmul.mubr.f32.gmra.mrb[0].mxu0 %v43
    %v457 = vpop.f32.mrb[0].mxu0
    %v458 = vadd.f32 %v384, %v457
    %v459 = vpop.f32.mrb[0].mxu0
    %v460 = vadd.f32 %v388, %v459
    %461 = vmatprep.mubr.f32.mxu0 %v50
    %462 = vmatmul.mubr.f32.gmra.mrb[0].mxu0 %v49
    %v463 = vpop.f32.mrb[0].mxu0
    %v464 = vadd.f32 %v384, %v463
    %v465 = vpop.f32.mrb[0].mxu0
    %v466 = vadd.f32 %v388, %v465
    %467 = vmatprep.mubr.f32.mxu0 %v56
    %468 = vmatmul.mubr.f32.gmra.mrb[0].mxu0 %v55
    %v469 = vpop.f32.mrb[0].mxu0
    %v470 = vadd.f32 %v384, %v469
    %v471 = vpop.f32.mrb[0].mxu0
    %v472 = vadd.f32 %v388, %v471
    %473 = vmatprep.mubr.f32.mxu0 %v62
    %474 = vmatmul.mubr.f32.gmra.mrb[0].mxu0 %v61
    %v475 = vpop.f32.mrb[0].mxu0
    %v476 = vadd.f32 %v384, %v475
    %v477 = vpop.f32.mrb[0].mxu0
    %v478 = vadd.f32 %v388, %v477
    %479 = vmatprep.mubr.f32.mxu0 %v68
    %480 = vmatmul.mubr.f32.gmra.mrb[0].mxu0 %v67
    %v481 = vpop.f32.mrb[0].mxu0
    %v482 = vadd.f32 %v384, %v481
    %v483 = vpop.f32.mrb[0].mxu0
    %v484 = vadd.f32 %v388, %v483
    %485 = vmatprep.mubr.f32.mxu0 %v74
    %486 = vmatmul.mubr.f32.gmra.mrb[0].mxu0 %v73
    %v487 = vpop.f32.mrb[0].mxu0
    %v488 = vadd.f32 %v384, %v487
    %v489 = vpop.f32.mrb[0].mxu0
    %v490 = vadd.f32 %v388, %v489
    %491 = vmatprep.mubr.f32.mxu0 %v80
    %492 = vmatmul.mubr.f32.gmra.mrb[0].mxu0 %v79
    %v493 = vpop.f32.mrb[0].mxu0
    %v494 = vadd.f32 %v384, %v493
    %v495 = vpop.f32.mrb[0].mxu0
    %v496 = vadd.f32 %v388, %v495
    %497 = vmatprep.mubr.f32.mxu0 %v86
    %498 = vmatmul.mubr.f32.gmra.mrb[0].mxu0 %v85
    %v499 = vpop.f32.mrb[0].mxu0
    %v500 = vadd.f32 %v384, %v499
    %v501 = vpop.f32.mrb[0].mxu0
    %v502 = vadd.f32 %v388, %v501
    %503 = vmatprep.mubr.f32.mxu0 %v92
    %504 = vmatmul.mubr.f32.gmra.mrb[0].mxu0 %v91
    %v505 = vpop.f32.mrb[0].mxu0
    %v506 = vadd.f32 %v384, %v505
    %v507 = vpop.f32.mrb[0].mxu0
    %v508 = vadd.f32 %v388, %v507
    %509 = vmatprep.mubr.f32.mxu0 %v98
    %510 = vmatmul.mubr.f32.gmra.mrb[0].mxu0 %v97
    %v511 = vpop.f32.mrb[0].mxu0
    %v512 = vadd.f32 %v384, %v511
    %v513 = vpop.f32.mrb[0].mxu0
    %v514 = vadd.f32 %v388, %v513
    %515 = vmatprep.mubr.f32.mxu0 %v104
    %516 = vmatmul.mubr.f32.gmra.mrb[0].mxu0 %v103
    %v517 = vpop.f32.mrb[0].mxu0
    %v518 = vadd.f32 %v384, %v517
    %v519 = vpop.f32.mrb[0].mxu0
    %v520 = vadd.f32 %v388, %v519
    %521 = vmatprep.mubr.f32.mxu0 %v110
    %522 = vmatmul.mubr.f32.gmra.mrb[0].mxu0 %v109
    %v523 = vpop.f32.mrb[0].mxu0
    %v524 = vadd.f32 %v384, %v523
    %v525 = vpop.f32.mrb[0].mxu0
    %v526 = vadd.f32 %v388, %v525
    %527 = vmatprep.mubr.f32.mxu0 %v116
    %528 = vmatmul.mubr.f32.gmra.mrb[0].mxu0 %v115
    %v529 = vpop.f32.mrb[0].mxu0
    %v530 = vadd.f32 %v384, %v529
    %v531 = vpop.f32.mrb[0].mxu0
    %v532 = vadd.f32 %v388, %v531
    %533 = vmatprep.mubr.f32.mxu0 %v122
    %534 = vmatmul.mubr.f32.gmra.mrb[0].mxu0 %v121
    %v535 = vpop.f32.mrb[0].mxu0
    %v536 = vadd.f32 %v384, %v535
    %v537 = vpop.f32.mrb[0].mxu0
    %v538 = vadd.f32 %v388, %v537
    %539 = vmatprep.mubr.f32.mxu0 %v128
    %540 = vmatmul.mubr.f32.gmra.mrb[0].mxu0 %v127
    %v541 = vpop.f32.mrb[0].mxu0
    %v542 = vadd.f32 %v384, %v541
    %v543 = vpop.f32.mrb[0].mxu0
    %v544 = vadd.f32 %v388, %v543
    %545 = vmatprep.mubr.f32.mxu0 %v134
    %546 = vmatmul.mubr.f32.gmra.mrb[0].mxu0 %v133
    %v547 = vpop.f32.mrb[0].mxu0
    %v548 = vadd.f32 %v384, %v547
    %v549 = vpop.f32.mrb[0].mxu0
    %v550 = vadd.f32 %v388, %v549
    %551 = vmatprep.mubr.f32.mxu0 %v140
    %552 = vmatmul.mubr.f32.gmra.mrb[0].mxu0 %v139
    %v553 = vpop.f32.mrb[0].mxu0
    %v554 = vadd.f32 %v384, %v553
    %v555 = vpop.f32.mrb[0].mxu0
    %v556 = vadd.f32 %v388, %v555
    %557 = vmatprep.mubr.f32.mxu0 %v146
    %558 = vmatmul.mubr.f32.gmra.mrb[0].mxu0 %v145
    %v559 = vpop.f32.mrb[0].mxu0
    %v560 = vadd.f32 %v384, %v559
    %v561 = vpop.f32.mrb[0].mxu0
    %v562 = vadd.f32 %v388, %v561
    %563 = vmatprep.mubr.f32.mxu0 %v152
    %564 = vmatmul.mubr.f32.gmra.mrb[0].mxu0 %v151
    %v565 = vpop.f32.mrb[0].mxu0
    %v566 = vadd.f32 %v384, %v565
    %v567 = vpop.f32.mrb[0].mxu0
    %v568 = vadd.f32 %v388, %v567
    %569 = vmatprep.mubr.f32.mxu0 %v158
    %570 = vmatmul.mubr.f32.gmra.mrb[0].mxu0 %v157
    %v571 = vpop.f32.mrb[0].mxu0
    %v572 = vadd.f32 %v384, %v571
    %v573 = vpop.f32.mrb[0].mxu0
    %v574 = vadd.f32 %v388, %v573
    %575 = vmatprep.mubr.f32.mxu0 %v164
    %576 = vmatmul.mubr.f32.gmra.mrb[0].mxu0 %v163
    %v577 = vpop.f32.mrb[0].mxu0
    %v578 = vadd.f32 %v384, %v577
    %v579 = vpop.f32.mrb[0].mxu0
    %v580 = vadd.f32 %v388, %v579
    %581 = vmatprep.mubr.f32.mxu0 %v170
    %582 = vmatmul.mubr.f32.gmra.mrb[0].mxu0 %v169
    %v583 = vpop.f32.mrb[0].mxu0
    %v584 = vadd.f32 %v384, %v583
    %v585 = vpop.f32.mrb[0].mxu0
    %v586 = vadd.f32 %v388, %v585
    %587 = vmatprep.mubr.f32.mxu0 %v176
    %588 = vmatmul.mubr.f32.gmra.mrb[0].mxu0 %v175
    %v589 = vpop.f32.mrb[0].mxu0
    %v590 = vadd.f32 %v384, %v589
    %v591 = vpop.f32.mrb[0].mxu0
    %v592 = vadd.f32 %v388, %v591
    %593 = vmatprep.mubr.f32.mxu0 %v182
    %594 = vmatmul.mubr.f32.gmra.mrb[0].mxu0 %v181
    %v595 = vpop.f32.mrb[0].mxu0
    %v596 = vadd.f32 %v384, %v595
    %v597 = vpop.f32.mrb[0].mxu0
    %v598 = vadd.f32 %v388, %v597
    %599 = vdwg.mxu0
    %600 = vmatprep.subr.mxu0 %v252
    %601 = vmatpush1.msra.mxu0 %v251
    %602 = vmatprep.subr.mxu0 %v254
    %603 = vmatpush1.msra.mxu0 %v253
    %604 = vmatprep.subr.mxu0 %v256
    %605 = vmatpush1.msra.mxu0 %v255
    %606 = vmatprep.subr.mxu0 %v258
    %607 = vmatpush1.msra.mxu0 %v257
    %608 = vmatprep.subr.mxu0 %v260
    %609 = vmatpush1.msra.mxu0 %v259
    %610 = vmatprep.subr.mxu0 %v262
    %611 = vmatpush1.msra.mxu0 %v261
    %612 = vmatprep.subr.mxu0 %v264
    %613 = vmatpush1.msra.mxu0 %v263
    %614 = vmatprep.subr.mxu0 %v266
    %615 = vmatpush1.msra.mxu0 %v265
    %616 = vmatprep.subr.mxu0 %v268
    %617 = vmatpush1.msra.mxu0 %v267
    %618 = vmatprep.subr.mxu0 %v270
    %619 = vmatpush1.msra.mxu0 %v269
    %620 = vmatprep.subr.mxu0 %v272
    %621 = vmatpush1.msra.mxu0 %v271
    %622 = vmatprep.subr.mxu0 %v274
    %623 = vmatpush1.msra.mxu0 %v273
    %624 = vmatprep.subr.mxu0 %v276
    %625 = vmatpush1.msra.mxu0 %v275
    %626 = vmatprep.subr.mxu0 %v278
    %627 = vmatpush1.msra.mxu0 %v277
    %628 = vmatprep.subr.mxu0 %v280
    %629 = vmatpush1.msra.mxu0 %v279
    %630 = vmatprep.subr.mxu0 %v282
    %631 = vmatpush1.msra.mxu0 %v281
    %632 = vmatprep.subr.mxu0 %v284
    %633 = vmatpush1.msra.mxu0 %v283
    %634 = vmatprep.subr.mxu0 %v286
    %635 = vmatpush1.msra.mxu0 %v285
    %636 = vmatprep.subr.mxu0 %v288
    %637 = vmatpush1.msra.mxu0 %v287
    %638 = vmatprep.subr.mxu0 %v290
    %639 = vmatpush1.msra.mxu0 %v289
    %640 = vmatprep.subr.mxu0 %v292
    %641 = vmatpush1.msra.mxu0 %v291
    %642 = vmatprep.subr.mxu0 %v294
    %643 = vmatpush1.msra.mxu0 %v293
    %644 = vmatprep.subr.mxu0 %v296
    %645 = vmatpush1.msra.mxu0 %v295
    %646 = vmatprep.subr.mxu0 %v298
    %647 = vmatpush1.msra.mxu0 %v297
    %648 = vmatprep.subr.mxu0 %v300
    %649 = vmatpush1.msra.mxu0 %v299
    %650 = vmatprep.subr.mxu0 %v302
    %651 = vmatpush1.msra.mxu0 %v301
    %652 = vmatprep.subr.mxu0 %v304
    %653 = vmatpush1.msra.mxu0 %v303
    %654 = vmatprep.subr.mxu0 %v306
    %655 = vmatpush1.msra.mxu0 %v305
    %656 = vmatprep.subr.mxu0 %v308
    %657 = vmatpush1.msra.mxu0 %v307
    %658 = vmatprep.subr.mxu0 %v310
    %659 = vmatpush1.msra.mxu0 %v309
    %660 = vmatprep.subr.mxu0 %v312
    %661 = vmatpush1.msra.mxu0 %v311
    %662 = vmatprep.subr.mxu0 %v314
    %663 = vmatpush1.msra.mxu0 %v313
    %664 = vmatprep.mubr.f32.mxu0 %v46
    %665 = vmatmul.mubr.f32.gmra.mrb[0].mxu0 %v45
    %v666 = vpop.f32.mrb[0].mxu0
    %v667 = vadd.f32 %v458, %v666
    %v668 = vpop.f32.mrb[0].mxu0
    %v669 = vadd.f32 %v460, %v668
    %670 = vmatprep.mubr.f32.mxu0 %v52
    %671 = vmatmul.mubr.f32.gmra.mrb[0].mxu0 %v51
    %v672 = vpop.f32.mrb[0].mxu0
    %v673 = vadd.f32 %v464, %v672
    %v674 = vpop.f32.mrb[0].mxu0
    %v675 = vadd.f32 %v466, %v674
    %676 = vmatprep.mubr.f32.mxu0 %v58
    %677 = vmatmul.mubr.f32.gmra.mrb[0].mxu0 %v57
    %v678 = vpop.f32.mrb[0].mxu0
    %v679 = vadd.f32 %v470, %v678
    %v680 = vpop.f32.mrb[0].mxu0
    %v681 = vadd.f32 %v472, %v680
    %682 = vmatprep.mubr.f32.mxu0 %v64
    %683 = vmatmul.mubr.f32.gmra.mrb[0].mxu0 %v63
    %v684 = vpop.f32.mrb[0].mxu0
    %v685 = vadd.f32 %v476, %v684
    %v686 = vpop.f32.mrb[0].mxu0
    %v687 = vadd.f32 %v478, %v686
    %688 = vmatprep.mubr.f32.mxu0 %v70
    %689 = vmatmul.mubr.f32.gmra.mrb[0].mxu0 %v69
    %v690 = vpop.f32.mrb[0].mxu0
    %v691 = vadd.f32 %v482, %v690
    %v692 = vpop.f32.mrb[0].mxu0
    %v693 = vadd.f32 %v484, %v692
    %694 = vmatprep.mubr.f32.mxu0 %v76
    %695 = vmatmul.mubr.f32.gmra.mrb[0].mxu0 %v75
    %v696 = vpop.f32.mrb[0].mxu0
    %v697 = vadd.f32 %v488, %v696
    %v698 = vpop.f32.mrb[0].mxu0
    %v699 = vadd.f32 %v490, %v698
    %700 = vmatprep.mubr.f32.mxu0 %v82
    %701 = vmatmul.mubr.f32.gmra.mrb[0].mxu0 %v81
    %v702 = vpop.f32.mrb[0].mxu0
    %v703 = vadd.f32 %v494, %v702
    %v704 = vpop.f32.mrb[0].mxu0
    %v705 = vadd.f32 %v496, %v704
    %706 = vmatprep.mubr.f32.mxu0 %v88
    %707 = vmatmul.mubr.f32.gmra.mrb[0].mxu0 %v87
    %v708 = vpop.f32.mrb[0].mxu0
    %v709 = vadd.f32 %v500, %v708
    %v710 = vpop.f32.mrb[0].mxu0
    %v711 = vadd.f32 %v502, %v710
    %712 = vmatprep.mubr.f32.mxu0 %v94
    %713 = vmatmul.mubr.f32.gmra.mrb[0].mxu0 %v93
    %v714 = vpop.f32.mrb[0].mxu0
    %v715 = vadd.f32 %v506, %v714
    %v716 = vpop.f32.mrb[0].mxu0
    %v717 = vadd.f32 %v508, %v716
    %718 = vmatprep.mubr.f32.mxu0 %v100
    %719 = vmatmul.mubr.f32.gmra.mrb[0].mxu0 %v99
    %v720 = vpop.f32.mrb[0].mxu0
    %v721 = vadd.f32 %v512, %v720
    %v722 = vpop.f32.mrb[0].mxu0
    %v723 = vadd.f32 %v514, %v722
    %724 = vmatprep.mubr.f32.mxu0 %v106
    %725 = vmatmul.mubr.f32.gmra.mrb[0].mxu0 %v105
    %v726 = vpop.f32.mrb[0].mxu0
    %v727 = vadd.f32 %v518, %v726
    %v728 = vpop.f32.mrb[0].mxu0
    %v729 = vadd.f32 %v520, %v728
    %730 = vmatprep.mubr.f32.mxu0 %v112
    %731 = vmatmul.mubr.f32.gmra.mrb[0].mxu0 %v111
    %v732 = vpop.f32.mrb[0].mxu0
    %v733 = vadd.f32 %v524, %v732
    %v734 = vpop.f32.mrb[0].mxu0
    %v735 = vadd.f32 %v526, %v734
    %736 = vmatprep.mubr.f32.mxu0 %v118
    %737 = vmatmul.mubr.f32.gmra.mrb[0].mxu0 %v117
    %v738 = vpop.f32.mrb[0].mxu0
    %v739 = vadd.f32 %v530, %v738
    %v740 = vpop.f32.mrb[0].mxu0
    %v741 = vadd.f32 %v532, %v740
    %742 = vmatprep.mubr.f32.mxu0 %v124
    %743 = vmatmul.mubr.f32.gmra.mrb[0].mxu0 %v123
    %v744 = vpop.f32.mrb[0].mxu0
    %v745 = vadd.f32 %v536, %v744
    %v746 = vpop.f32.mrb[0].mxu0
    %v747 = vadd.f32 %v538, %v746
    %748 = vmatprep.mubr.f32.mxu0 %v130
    %749 = vmatmul.mubr.f32.gmra.mrb[0].mxu0 %v129
    %v750 = vpop.f32.mrb[0].mxu0
    %v751 = vadd.f32 %v542, %v750
    %v752 = vpop.f32.mrb[0].mxu0
    %v753 = vadd.f32 %v544, %v752
    %754 = vmatprep.mubr.f32.mxu0 %v136
    %755 = vmatmul.mubr.f32.gmra.mrb[0].mxu0 %v135
    %v756 = vpop.f32.mrb[0].mxu0
    %v757 = vadd.f32 %v548, %v756
    %v758 = vpop.f32.mrb[0].mxu0
    %v759 = vadd.f32 %v550, %v758
    %760 = vmatprep.mubr.f32.mxu0 %v142
    %761 = vmatmul.mubr.f32.gmra.mrb[0].mxu0 %v141
    %v762 = vpop.f32.mrb[0].mxu0
    %v763 = vadd.f32 %v554, %v762
    %v764 = vpop.f32.mrb[0].mxu0
    %v765 = vadd.f32 %v556, %v764
    %766 = vmatprep.mubr.f32.mxu0 %v148
    %767 = vmatmul.mubr.f32.gmra.mrb[0].mxu0 %v147
    %v768 = vpop.f32.mrb[0].mxu0
    %v769 = vadd.f32 %v560, %v768
    %v770 = vpop.f32.mrb[0].mxu0
    %v771 = vadd.f32 %v562, %v770
    %772 = vmatprep.mubr.f32.mxu0 %v154
    %773 = vmatmul.mubr.f32.gmra.mrb[0].mxu0 %v153
    %v774 = vpop.f32.mrb[0].mxu0
    %v775 = vadd.f32 %v566, %v774
    %v776 = vpop.f32.mrb[0].mxu0
    %v777 = vadd.f32 %v568, %v776
    %778 = vmatprep.mubr.f32.mxu0 %v160
    %779 = vmatmul.mubr.f32.gmra.mrb[0].mxu0 %v159
    %v780 = vpop.f32.mrb[0].mxu0
    %v781 = vadd.f32 %v572, %v780
    %v782 = vpop.f32.mrb[0].mxu0
    %v783 = vadd.f32 %v574, %v782
    %784 = vmatprep.mubr.f32.mxu0 %v166
    %785 = vmatmul.mubr.f32.gmra.mrb[0].mxu0 %v165
    %v786 = vpop.f32.mrb[0].mxu0
    %v787 = vadd.f32 %v578, %v786
    %v788 = vpop.f32.mrb[0].mxu0
    %v789 = vadd.f32 %v580, %v788
    %790 = vmatprep.mubr.f32.mxu0 %v172
    %791 = vmatmul.mubr.f32.gmra.mrb[0].mxu0 %v171
    %v792 = vpop.f32.mrb[0].mxu0
    %v793 = vadd.f32 %v584, %v792
    %v794 = vpop.f32.mrb[0].mxu0
    %v795 = vadd.f32 %v586, %v794
    %796 = vmatprep.mubr.f32.mxu0 %v178
    %797 = vmatmul.mubr.f32.gmra.mrb[0].mxu0 %v177
    %v798 = vpop.f32.mrb[0].mxu0
    %v799 = vadd.f32 %v590, %v798
    %v800 = vpop.f32.mrb[0].mxu0
    %v801 = vadd.f32 %v592, %v800
    %802 = vmatprep.mubr.f32.mxu0 %v184
    %803 = vmatmul.mubr.f32.gmra.mrb[0].mxu0 %v183
    %v804 = vpop.f32.mrb[0].mxu0
    %v805 = vadd.f32 %v596, %v804
    %v806 = vpop.f32.mrb[0].mxu0
    %v807 = vadd.f32 %v598, %v806
    %808 = vdwg.mxu0
    %809 = vmatprep.subr.mxu0 %v316
    %810 = vmatpush1.msra.mxu0 %v315
    %811 = vmatprep.subr.mxu0 %v318
    %812 = vmatpush1.msra.mxu0 %v317
    %813 = vmatprep.subr.mxu0 %v320
    %814 = vmatpush1.msra.mxu0 %v319
    %815 = vmatprep.subr.mxu0 %v322
    %816 = vmatpush1.msra.mxu0 %v321
    %817 = vmatprep.subr.mxu0 %v324
    %818 = vmatpush1.msra.mxu0 %v323
    %819 = vmatprep.subr.mxu0 %v326
    %820 = vmatpush1.msra.mxu0 %v325
    %821 = vmatprep.subr.mxu0 %v328
    %822 = vmatpush1.msra.mxu0 %v327
    %823 = vmatprep.subr.mxu0 %v330
    %824 = vmatpush1.msra.mxu0 %v329
    %825 = vmatprep.subr.mxu0 %v332
    %826 = vmatpush1.msra.mxu0 %v331
    %827 = vmatprep.subr.mxu0 %v334
    %828 = vmatpush1.msra.mxu0 %v333
    %829 = vmatprep.subr.mxu0 %v336
    %830 = vmatpush1.msra.mxu0 %v335
    %831 = vmatprep.subr.mxu0 %v338
    %832 = vmatpush1.msra.mxu0 %v337
    %833 = vmatprep.subr.mxu0 %v340
    %834 = vmatpush1.msra.mxu0 %v339
    %835 = vmatprep.subr.mxu0 %v342
    %836 = vmatpush1.msra.mxu0 %v341
    %837 = vmatprep.subr.mxu0 %v344
    %838 = vmatpush1.msra.mxu0 %v343
    %839 = vmatprep.subr.mxu0 %v346
    %840 = vmatpush1.msra.mxu0 %v345
    %841 = vmatprep.subr.mxu0 %v348
    %842 = vmatpush1.msra.mxu0 %v347
    %843 = vmatprep.subr.mxu0 %v350
    %844 = vmatpush1.msra.mxu0 %v349
    %845 = vmatprep.subr.mxu0 %v352
    %846 = vmatpush1.msra.mxu0 %v351
    %847 = vmatprep.subr.mxu0 %v354
    %848 = vmatpush1.msra.mxu0 %v353
    %849 = vmatprep.subr.mxu0 %v356
    %850 = vmatpush1.msra.mxu0 %v355
    %851 = vmatprep.subr.mxu0 %v358
    %852 = vmatpush1.msra.mxu0 %v357
    %853 = vmatprep.subr.mxu0 %v360
    %854 = vmatpush1.msra.mxu0 %v359
    %855 = vmatprep.subr.mxu0 %v362
    %856 = vmatpush1.msra.mxu0 %v361
    %857 = vmatprep.subr.mxu0 %v364
    %858 = vmatpush1.msra.mxu0 %v363
    %859 = vmatprep.subr.mxu0 %v366
    %860 = vmatpush1.msra.mxu0 %v365
    %861 = vmatprep.subr.mxu0 %v368
    %862 = vmatpush1.msra.mxu0 %v367
    %863 = vmatprep.subr.mxu0 %v370
    %864 = vmatpush1.msra.mxu0 %v369
    %865 = vmatprep.subr.mxu0 %v372
    %866 = vmatpush1.msra.mxu0 %v371
    %867 = vmatprep.subr.mxu0 %v374
    %868 = vmatpush1.msra.mxu0 %v373
    %869 = vmatprep.subr.mxu0 %v376
    %870 = vmatpush1.msra.mxu0 %v375
    %871 = vmatprep.subr.mxu0 %v378
    %872 = vmatpush1.msra.mxu0 %v377
    %873 = vmatprep.mubr.f32.mxu0 %v48
    %874 = vmatmul.mubr.f32.gmra.mrb[0].mxu0 %v47
    %v875 = vpop.f32.mrb[0].mxu0
    %v876 = vadd.f32 %v667, %v875
    %v877 = vpop.f32.mrb[0].mxu0
    %v878 = vadd.f32 %v669, %v877
    %879 = vmatprep.mubr.f32.mxu0 %v54
    %880 = vmatmul.mubr.f32.gmra.mrb[0].mxu0 %v53
    %v881 = vpop.f32.mrb[0].mxu0
    %v882 = vadd.f32 %v673, %v881
    %v883 = vpop.f32.mrb[0].mxu0
    %v884 = vadd.f32 %v675, %v883
    %885 = vmatprep.mubr.f32.mxu0 %v60
    %886 = vmatmul.mubr.f32.gmra.mrb[0].mxu0 %v59
    %v887 = vpop.f32.mrb[0].mxu0
    %v888 = vadd.f32 %v679, %v887
    %v889 = vpop.f32.mrb[0].mxu0
    %v890 = vadd.f32 %v681, %v889
    %891 = vmatprep.mubr.f32.mxu0 %v66
    %892 = vmatmul.mubr.f32.gmra.mrb[0].mxu0 %v65
    %v893 = vpop.f32.mrb[0].mxu0
    %v894 = vadd.f32 %v685, %v893
    %v895 = vpop.f32.mrb[0].mxu0
    %v896 = vadd.f32 %v687, %v895
    %897 = vmatprep.mubr.f32.mxu0 %v72
    %898 = vmatmul.mubr.f32.gmra.mrb[0].mxu0 %v71
    %v899 = vpop.f32.mrb[0].mxu0
    %v900 = vadd.f32 %v691, %v899
    %v901 = vpop.f32.mrb[0].mxu0
    %v902 = vadd.f32 %v693, %v901
    %903 = vmatprep.mubr.f32.mxu0 %v78
    %904 = vmatmul.mubr.f32.gmra.mrb[0].mxu0 %v77
    %v905 = vpop.f32.mrb[0].mxu0
    %v906 = vadd.f32 %v697, %v905
    %v907 = vpop.f32.mrb[0].mxu0
    %v908 = vadd.f32 %v699, %v907
    %909 = vmatprep.mubr.f32.mxu0 %v84
    %910 = vmatmul.mubr.f32.gmra.mrb[0].mxu0 %v83
    %v911 = vpop.f32.mrb[0].mxu0
    %v912 = vadd.f32 %v703, %v911
    %v913 = vpop.f32.mrb[0].mxu0
    %v914 = vadd.f32 %v705, %v913
    %915 = vmatprep.mubr.f32.mxu0 %v90
    %916 = vmatmul.mubr.f32.gmra.mrb[0].mxu0 %v89
    %v917 = vpop.f32.mrb[0].mxu0
    %v918 = vadd.f32 %v709, %v917
    %v919 = vpop.f32.mrb[0].mxu0
    %v920 = vadd.f32 %v711, %v919
    %921 = vmatprep.mubr.f32.mxu0 %v96
    %922 = vmatmul.mubr.f32.gmra.mrb[0].mxu0 %v95
    %v923 = vpop.f32.mrb[0].mxu0
    %v924 = vadd.f32 %v715, %v923
    %v925 = vpop.f32.mrb[0].mxu0
    %v926 = vadd.f32 %v717, %v925
    %927 = vmatprep.mubr.f32.mxu0 %v102
    %928 = vmatmul.mubr.f32.gmra.mrb[0].mxu0 %v101
    %v929 = vpop.f32.mrb[0].mxu0
    %v930 = vadd.f32 %v721, %v929
    %v931 = vpop.f32.mrb[0].mxu0
    %v932 = vadd.f32 %v723, %v931
    %933 = vmatprep.mubr.f32.mxu0 %v108
    %934 = vmatmul.mubr.f32.gmra.mrb[0].mxu0 %v107
    %v935 = vpop.f32.mrb[0].mxu0
    %v936 = vadd.f32 %v727, %v935
    %v937 = vpop.f32.mrb[0].mxu0
    %v938 = vadd.f32 %v729, %v937
    %939 = vmatprep.mubr.f32.mxu0 %v114
    %940 = vmatmul.mubr.f32.gmra.mrb[0].mxu0 %v113
    %v941 = vpop.f32.mrb[0].mxu0
    %v942 = vadd.f32 %v733, %v941
    %v943 = vpop.f32.mrb[0].mxu0
    %v944 = vadd.f32 %v735, %v943
    %945 = vmatprep.mubr.f32.mxu0 %v120
    %946 = vmatmul.mubr.f32.gmra.mrb[0].mxu0 %v119
    %v947 = vpop.f32.mrb[0].mxu0
    %v948 = vadd.f32 %v739, %v947
    %v949 = vpop.f32.mrb[0].mxu0
    %v950 = vadd.f32 %v741, %v949
    %951 = vmatprep.mubr.f32.mxu0 %v126
    %952 = vmatmul.mubr.f32.gmra.mrb[0].mxu0 %v125
    %v953 = vpop.f32.mrb[0].mxu0
    %v954 = vadd.f32 %v745, %v953
    %v955 = vpop.f32.mrb[0].mxu0
    %v956 = vadd.f32 %v747, %v955
    %957 = vmatprep.mubr.f32.mxu0 %v132
    %958 = vmatmul.mubr.f32.gmra.mrb[0].mxu0 %v131
    %v959 = vpop.f32.mrb[0].mxu0
    %v960 = vadd.f32 %v751, %v959
    %v961 = vpop.f32.mrb[0].mxu0
    %v962 = vadd.f32 %v753, %v961
    %963 = vmatprep.mubr.f32.mxu0 %v138
    %964 = vmatmul.mubr.f32.gmra.mrb[0].mxu0 %v137
    %v965 = vpop.f32.mrb[0].mxu0
    %v966 = vadd.f32 %v757, %v965
    %v967 = vpop.f32.mrb[0].mxu0
    %v968 = vadd.f32 %v759, %v967
    %969 = vmatprep.mubr.f32.mxu0 %v144
    %970 = vmatmul.mubr.f32.gmra.mrb[0].mxu0 %v143
    %v971 = vpop.f32.mrb[0].mxu0
    %v972 = vadd.f32 %v763, %v971
    %v973 = vpop.f32.mrb[0].mxu0
    %v974 = vadd.f32 %v765, %v973
    %975 = vmatprep.mubr.f32.mxu0 %v150
    %976 = vmatmul.mubr.f32.gmra.mrb[0].mxu0 %v149
    %v977 = vpop.f32.mrb[0].mxu0
    %v978 = vadd.f32 %v769, %v977
    %v979 = vpop.f32.mrb[0].mxu0
    %v980 = vadd.f32 %v771, %v979
    %981 = vmatprep.mubr.f32.mxu0 %v156
    %982 = vmatmul.mubr.f32.gmra.mrb[0].mxu0 %v155
    %v983 = vpop.f32.mrb[0].mxu0
    %v984 = vadd.f32 %v775, %v983
    %v985 = vpop.f32.mrb[0].mxu0
    %v986 = vadd.f32 %v777, %v985
    %987 = vmatprep.mubr.f32.mxu0 %v162
    %988 = vmatmul.mubr.f32.gmra.mrb[0].mxu0 %v161
    %v989 = vpop.f32.mrb[0].mxu0
    %v990 = vadd.f32 %v781, %v989
    %v991 = vpop.f32.mrb[0].mxu0
    %v992 = vadd.f32 %v783, %v991
    %993 = vmatprep.mubr.f32.mxu0 %v168
    %994 = vmatmul.mubr.f32.gmra.mrb[0].mxu0 %v167
    %v995 = vpop.f32.mrb[0].mxu0
    %v996 = vadd.f32 %v787, %v995
    %v997 = vpop.f32.mrb[0].mxu0
    %v998 = vadd.f32 %v789, %v997
    %999 = vmatprep.mubr.f32.mxu0 %v174
    %1000 = vmatmul.mubr.f32.gmra.mrb[0].mxu0 %v173
    %v1001 = vpop.f32.mrb[0].mxu0
    %v1002 = vadd.f32 %v793, %v1001
    %v1003 = vpop.f32.mrb[0].mxu0
    %v1004 = vadd.f32 %v795, %v1003
    %1005 = vmatprep.mubr.f32.mxu0 %v180
    %1006 = vmatmul.mubr.f32.gmra.mrb[0].mxu0 %v179
    %v1007 = vpop.f32.mrb[0].mxu0
    %v1008 = vadd.f32 %v799, %v1007
    %v1009 = vpop.f32.mrb[0].mxu0
    %v1010 = vadd.f32 %v801, %v1009
    %1011 = vmatprep.mubr.f32.mxu0 %v186
    %1012 = vmatmul.mubr.f32.gmra.mrb[0].mxu0 %v185
    %v1013 = vpop.f32.mrb[0].mxu0
    %v1014 = vadd.f32 %v805, %v1013
    %v1015 = vpop.f32.mrb[0].mxu0
    %v1016 = vadd.f32 %v807, %v1015
    %1017 = vdwg.mxu0
    %1018 = vst [vmem:[#allocation7] sm:$0xff] %v876
    %1019 = vst [vmem:[#allocation7 + $0x8] sm:$0xff] %v878
    %1020 = vst [vmem:[#allocation7 + $0x10] sm:$0xff] %v882
    %1021 = vst [vmem:[#allocation7 + $0x18] sm:$0xff] %v884
    %1022 = vst [vmem:[#allocation7 + $0x20] sm:$0xff] %v888
    %1023 = vst [vmem:[#allocation7 + $0x28] sm:$0xff] %v890
    %1024 = vst [vmem:[#allocation7 + $0x30] sm:$0xff] %v894
    %1025 = vst [vmem:[#allocation7 + $0x38] sm:$0xff] %v896
    %1026 = vst [vmem:[#allocation7 + $0x40] sm:$0xff] %v900
    %1027 = vst [vmem:[#allocation7 + $0x48] sm:$0xff] %v902
    %1028 = vst [vmem:[#allocation7 + $0x50] sm:$0xff] %v906
    %1029 = vst [vmem:[#allocation7 + $0x58] sm:$0xff] %v908
    %1030 = vst [vmem:[#allocation7 + $0x60] sm:$0xff] %v912
    %1031 = vst [vmem:[#allocation7 + $0x68] sm:$0xff] %v914
    %1032 = vst [vmem:[#allocation7 + $0x70] sm:$0xff] %v918
    %1033 = vst [vmem:[#allocation7 + $0x78] sm:$0xff] %v920
    %1034 = vst [vmem:[#allocation7 + $0x80] sm:$0xff] %v924
    %1035 = vst [vmem:[#allocation7 + $0x88] sm:$0xff] %v926
    %1036 = vst [vmem:[#allocation7 + $0x90] sm:$0xff] %v930
    %1037 = vst [vmem:[#allocation7 + $0x98] sm:$0xff] %v932
    %1038 = vst [vmem:[#allocation7 + $0xa0] sm:$0xff] %v936
    %1039 = vst [vmem:[#allocation7 + $0xa8] sm:$0xff] %v938
    %1040 = vst [vmem:[#allocation7 + $0xb0] sm:$0xff] %v942
    %1041 = vst [vmem:[#allocation7 + $0xb8] sm:$0xff] %v944
    %1042 = vst [vmem:[#allocation7 + $0xc0] sm:$0xff] %v948
    %1043 = vst [vmem:[#allocation7 + $0xc8] sm:$0xff] %v950
    %1044 = vst [vmem:[#allocation7 + $0xd0] sm:$0xff] %v954
    %1045 = vst [vmem:[#allocation7 + $0xd8] sm:$0xff] %v956
    %1046 = vst [vmem:[#allocation7 + $0xe0] sm:$0xff] %v960
    %1047 = vst [vmem:[#allocation7 + $0xe8] sm:$0xff] %v962
    %1048 = vst [vmem:[#allocation7 + $0xf0] sm:$0xff] %v966
    %1049 = vst [vmem:[#allocation7 + $0xf8] sm:$0xff] %v968
    %1050 = vst [vmem:[#allocation7 + $0x100] sm:$0xff] %v972
    %1051 = vst [vmem:[#allocation7 + $0x108] sm:$0xff] %v974
    %1052 = vst [vmem:[#allocation7 + $0x110] sm:$0xff] %v978
    %1053 = vst [vmem:[#allocation7 + $0x118] sm:$0xff] %v980
    %1054 = vst [vmem:[#allocation7 + $0x120] sm:$0xff] %v984
    %1055 = vst [vmem:[#allocation7 + $0x128] sm:$0xff] %v986
    %1056 = vst [vmem:[#allocation7 + $0x130] sm:$0xff] %v990
    %1057 = vst [vmem:[#allocation7 + $0x138] sm:$0xff] %v992
    %1058 = vst [vmem:[#allocation7 + $0x140] sm:$0xff] %v996
    %1059 = vst [vmem:[#allocation7 + $0x148] sm:$0xff] %v998
    %1060 = vst [vmem:[#allocation7 + $0x150] sm:$0xff] %v1002
    %1061 = vst [vmem:[#allocation7 + $0x158] sm:$0xff] %v1004
    %1062 = vst [vmem:[#allocation7 + $0x160] sm:$0xff] %v1008
    %1063 = vst [vmem:[#allocation7 + $0x168] sm:$0xff] %v1010
    %1064 = vst [vmem:[#allocation7 + $0x170] sm:$0xff] %v1014
    %1065 = vst [vmem:[#allocation7 + $0x178] sm:$0xff] %v1016
    // Predicated region
    $region22: #{tpu_custom_call.1} parent=1 // pred_check
      _
    $region23: #{tpu_custom_call.1} parent=1 // pred_check_branch
      %1067 = sbr.rel (0) target = $region25
    $region24: #{tpu_custom_call.1} parent=1 // pred_region
      %s1069 = ssub.s32 6144, 6144
      %1070 = vsyncadd [#allocation4], %s1069
      %s1071 = sshll.u32 [#allocation7], 4
      %s1072 = int_to_ptr.vmem [resolvable:$true] %s1071
      %1077 = dma.vmem_to_hbm [thread:$0]  %s1072, 6144, %s3, [#allocation4], 256, 256, 16
    $region25: #{tpu_custom_call.1} parent=1 // pred_fallthru
      _
    // Predicated region
    $region26: #{tpu_custom_call.1} parent=1 // pred_check
      _
    $region27: #{tpu_custom_call.1} parent=1 // pred_check_branch
      %1079 = sbr.rel (0) target = $region29
    $region28: #{tpu_custom_call.1} parent=1 // pred_region
      %1080 = dma.done [#allocation4], 6144
    $region29: #{tpu_custom_call.1} parent=1 // pred_fallthru
      _
    %1081 = vsyncpa [#allocation3], 1
    %1082 = vsyncpa [#allocation6], 1
    %1083 = vsyncpa [#allocation4], 1

</llo_original>
